<compile_context>
chip_gen: v6e
topology: v6e:2x2x1
jax: 0.10.0
libtpu: 0.0.40
codegen_flags: <defaults>
</compile_context>

<pallas_src>
import functools

import jax
import jax.numpy as jnp
from jax import lax
from jax.experimental import pallas as pl
from jax.experimental.pallas import tpu as pltpu

_LANES = 128
_MAX_TILE_ROWS = 512      # ~64K pixels per grid step (perf-review sweet spot)


def _focal_loss_kernel(logits_ref, targets_ref, out_ref, *,
                       num_classes, tile_s, hw128, chunks_per_part,
                       needs_row_mask, alpha, gamma, ignore_index):
    """One (pixel-split, batch, pixel-chunk) grid step.

    logits_ref : (1, C, S, 128)  native dtype (f32 / bf16)
    targets_ref: (1, 1, S, 128)  integer class ids (ignore_index allowed)
    out_ref    : (1, 1, S, 128)  f32 partial sums, resident across chunk axis
    """
    p = pl.program_id(0)          # parallel pixel split (helps v7x when B==1)
    j = pl.program_id(2)          # chunk (reduction) axis — last, "arbitrary"

    @pl.when(j == 0)
    def _init():
        out_ref[...] = jnp.zeros_like(out_ref)

    # ---- streamed class reduction: only (S,128) f32 temporaries -----------
    # Pass 1: running max over classes (pure VPU element-wise work).
    m = logits_ref[0, 0].astype(jnp.float32)
    for c in range(1, num_classes):
        m = jnp.maximum(m, logits_ref[0, c].astype(jnp.float32))

    t = targets_ref[0, 0].astype(jnp.int32)                     # (S, 128)

    need_pt = gamma != 0.0
    # Pass 2: fused sum(exp(x_c - m)), target-class logit select, and (when
    # gamma != 0) the target-class exp term — reused later for pt so the
    # focal path costs no extra EUP exp.
    sumexp = jnp.zeros_like(m)
    sel = jnp.zeros_like(m)
    sel_exp = jnp.zeros_like(m)
    for c in range(num_classes):
        xc = logits_ref[0, c].astype(jnp.float32)
        e = jnp.exp(xc - m)
        sumexp = sumexp + e
        hit = t == c
        sel = jnp.where(hit, xc, sel)
        if need_pt:
            sel_exp = jnp.where(hit, e, sel_exp)

    lse = m + jnp.log(sumexp)
    ce = jnp.maximum(lse - sel, 0.0)      # lse >= sel exactly; clamp fp noise

    if not need_pt:                        # gamma == 0 : module default
        focal = alpha * ce
    else:
        # pt = exp(-ce) = exp(sel - lse) = exp(sel - m) / sumexp, built from
        # quantities already computed.  (pl.reciprocal(approx=True) would be a
        # further EUP saving if ~1e-3 relative error were acceptable.)
        pt = sel_exp * pl.reciprocal(sumexp)
        one_m_pt = jnp.maximum(1.0 - pt, 0.0)
        if float(gamma).is_integer():      # common case (gamma = 1, 2, ...)
            w = one_m_pt
            for _ in range(int(gamma) - 1):
                w = w * one_m_pt
        else:
            w = one_m_pt ** gamma
        focal = alpha * w * ce

    valid = t != ignore_index
    if needs_row_mask:
        # cdiv tiling / parallel split: mask pixel rows past the real extent
        # (out-of-bounds block rows may contain garbage — never accumulated).
        chunk = p * chunks_per_part + j
        row = lax.broadcasted_iota(jnp.int32, (tile_s, _LANES), 0)
        valid = valid & ((chunk * tile_s + row) < hw128)

    out_ref[0, 0] += jnp.where(valid, focal, 0.0)


def _vmem_budget_bytes():
    """~Half of physical VMEM per TensorCore; conservative fallback = v7x."""
    try:
        cap = int(pltpu.get_tpu_info().vmem_capacity_bytes)
    except Exception:
        cap = 64 << 20          # v7x has the smallest VMEM (64 MiB / TC)
    return max(16 << 20, min(cap // 2, 96 << 20))


def _pick_tile_rows(hw128, num_classes, logits_itemsize, tgt_itemsize,
                    budget, max_rows):
    """Largest pixel-row tile S fitting the VMEM budget (double-buffered
    input blocks + streamed f32 temporaries), multiple of 8, capped."""
    per_row = _LANES * (2 * num_classes * logits_itemsize   # logits block x2
                        + 2 * tgt_itemsize                   # targets block x2
                        + 2 * 4                              # resident output
                        + 8 * 4)                             # f32 temporaries
    cap = int((budget * 3 // 4) // per_row)
    cap = min(cap, max_rows)
    cap -= cap % 8
    cap = max(cap, 8)
    if hw128 <= cap:
        return hw128            # full extent is always a legal block dim
    return cap


def focal_loss(logits, targets, *, alpha=1.0, gamma=0.0,
               size_average=True, ignore_index=255, max_tile_rows=None):
    """logits: (B, C, H, W) float (f32 or bf16); targets: (B, H, W) int ids."""
    B, C, H, W = logits.shape
    assert targets.shape == (B, H, W)

    # Keep targets in a narrow integer dtype if possible (less HBM traffic).
    if (not jnp.issubdtype(targets.dtype, jnp.integer)
            or targets.dtype.itemsize > 4):
        targets = targets.astype(jnp.int32)

    hw = H * W
    hw_pad = pl.cdiv(hw, _LANES) * _LANES
    logits_flat = logits.reshape(B, C, hw)
    targets_flat = targets.reshape(B, hw)
    if hw_pad != hw:
        # Single pad pass only when H*W is not a multiple of 128 lanes; padded
        # pixels carry ignore_index so they contribute 0 to the sum.
        logits_flat = jnp.pad(logits_flat, ((0, 0), (0, 0), (0, hw_pad - hw)))
        targets_flat = jnp.pad(targets_flat, ((0, 0), (0, hw_pad - hw)),
                               constant_values=int(ignore_index))
    hw128 = hw_pad // _LANES

    # Row-major views only — no data movement.
    logits_r = logits_flat.reshape(B, C, hw128, _LANES)
    targets_r = targets_flat.reshape(B, 1, hw128, _LANES)

    budget = _vmem_budget_bytes()
    S = _pick_tile_rows(hw128, C, logits.dtype.itemsize,
                        targets_r.dtype.itemsize, budget,
                        max_tile_rows or _MAX_TILE_ROWS)
    n_chunks = pl.cdiv(hw128, S)

    # Give v7x's second TensorCore work when the batch alone can't fill it.
    P = 2 if (B == 1 and n_chunks > 1) else 1
    cpp = pl.cdiv(n_chunks, P)                      # chunks per parallel part
    needs_row_mask = (P * cpp * S) != hw128
    last_chunk = n_chunks - 1

    def in_map(p, b, j):
        # Clamp so an over-shooting parallel part never indexes past the last
        # block; its rows are masked to zero inside the kernel.
        return (b, 0, jnp.minimum(p * cpp + j, last_chunk), 0)

    kernel = functools.partial(
        _focal_loss_kernel,
        num_classes=C, tile_s=S, hw128=hw128, chunks_per_part=cpp,
        needs_row_mask=needs_row_mask,
        alpha=float(alpha), gamma=float(gamma), ignore_index=int(ignore_index))

    partials = pl.pallas_call(
        kernel,
        out_shape=jax.ShapeDtypeStruct((P, B, S, _LANES), jnp.float32),
        grid=(P, B, cpp),
        in_specs=[
            pl.BlockSpec((1, C, S, _LANES), in_map),
            pl.BlockSpec((1, 1, S, _LANES), in_map),
        ],
        out_specs=pl.BlockSpec((1, 1, S, _LANES), lambda p, b, j: (p, b, 0, 0)),
        compiler_params=pltpu.CompilerParams(
            dimension_semantics=("parallel", "parallel", "arbitrary"),
            vmem_limit_bytes=int(budget),
        ),
    )(logits_r, targets_r)

    total = jnp.sum(partials)                        # tiny final reduction
    if size_average:
        # Mean over ALL pixels (reduction='none' + .mean(): ignored pixels
        # contribute 0 but still count in the denominator).
        return total / jnp.float32(B * H * W)
    return total


def _reference_focal_loss(logits, targets, *, alpha=1.0, gamma=0.0,
                          size_average=True, ignore_index=255):
    """Pure-JAX reference mirroring F.cross_entropy(reduction='none') + focal."""
    x = logits.astype(jnp.float32)
    t = targets.astype(jnp.int32)
    lse = jax.scipy.special.logsumexp(x, axis=1)                 # (B, H, W)
    valid = t != ignore_index
    t_safe = jnp.where(valid, t, 0)
    sel = jnp.take_along_axis(x, t_safe[:, None], axis=1)[:, 0]  # (B, H, W)
    ce = jnp.where(valid, jnp.maximum(lse - sel, 0.0), 0.0)
    pt = jnp.exp(-ce)
    focal = alpha * (1.0 - pt) ** gamma * ce
    return jnp.mean(focal) if size_average else jnp.sum(focal)


if __name__ == "__main__":
    key = jax.random.PRNGKey(0)
    k1, k2, k3, k4, k5, k6 = jax.random.split(key, 6)

    # Case 1/2: default module settings and the focal (gamma=2) path.
    B, C, H, W = 2, 4, 16, 16
    logits = jax.random.normal(k1, (B, C, H, W), dtype=jnp.float32)
    targets = jax.random.randint(k2, (B, H, W), 0, C, dtype=jnp.int32)
    targets = jnp.where(jax.random.uniform(k3, (B, H, W)) < 0.1,
                        jnp.int32(255), targets)

    loss = jax.block_until_ready(focal_loss(logits, targets))
    ref = _reference_focal_loss(logits, targets)
    assert jnp.allclose(loss, ref, rtol=1e-5, atol=1e-6), (loss, ref)

    loss2 = jax.block_until_ready(
        focal_loss(logits, targets, alpha=0.25, gamma=2.0))
    ref2 = _reference_focal_loss(logits, targets, alpha=0.25, gamma=2.0)
    assert jnp.allclose(loss2, ref2, rtol=1e-5, atol=1e-6), (loss2, ref2)

    # Case 3: H*W not a multiple of 128, forced multi-chunk cdiv tiling with
    # tail-row masking, and the B==1 parallel pixel split (v7x second core).
    B3, C3, H3, W3 = 1, 4, 36, 36
    logits3 = jax.random.normal(k4, (B3, C3, H3, W3), dtype=jnp.float32)
    targets3 = jax.random.randint(k5, (B3, H3, W3), 0, C3, dtype=jnp.int32)
    targets3 = jnp.where(jax.random.uniform(k6, (B3, H3, W3)) < 0.1,
                         jnp.int32(255), targets3)
    loss3 = jax.block_until_ready(
        focal_loss(logits3, targets3, alpha=0.25, gamma=2.0, max_tile_rows=8))
    ref3 = _reference_focal_loss(logits3, targets3, alpha=0.25, gamma=2.0)
    assert jnp.allclose(loss3, ref3, rtol=1e-5, atol=1e-6), (loss3, ref3)

    print("KERNEL_OK")
</pallas_src>

<mosaic_0001>
module attributes {stable_mosaic.version = 11 : i64} {
  func.func @_focal_loss_kernel(%arg0: i32, %arg1: i32, %arg2: i32, %arg3: memref<1x4x2x128xf32, #tpu.memory_space<vmem>>, %arg4: memref<1x1x2x128xi32, #tpu.memory_space<vmem>>, %arg5: memref<1x1x2x128xf32, #tpu.memory_space<vmem>>) attributes {dimension_semantics = [#tpu.dimension_semantics<parallel>, #tpu.dimension_semantics<parallel>, #tpu.dimension_semantics<arbitrary>], iteration_bounds = array<i64: 1, 2, 1>, scalar_prefetch = 0 : i64, scratch_operands = 0 : i64, tpu.core_type = #tpu.core_type<tc>, window_params = [{transform_indices = @transform_0, window_bounds = array<i64: 1, 4, 2, 128>}, {transform_indices = @transform_1, window_bounds = array<i64: 1, 1, 2, 128>}, {transform_indices = @transform_2, window_bounds = array<i64: 1, 1, 2, 128>}]} {
    %c0_i32 = arith.constant 0 : i32
    %0 = arith.cmpi eq, %arg2, %c0_i32 : i32
    %1 = arith.extui %0 : i1 to i32
    %c0_i32_0 = arith.constant 0 : i32
    %2 = arith.cmpi ne, %1, %c0_i32_0 : i32
    scf.if %2 {
      %cst_46 = arith.constant 0.000000e+00 : f32
      %67 = vector.broadcast %cst_46 : f32 to vector<1x1x2x128xf32>
      %c0_47 = arith.constant 0 : index
      %c0_48 = arith.constant 0 : index
      %c0_49 = arith.constant 0 : index
      %c0_50 = arith.constant 0 : index
      %68 = vector.load %arg5[%c0_47, %c0_48, %c0_49, %c0_50] : memref<1x1x2x128xf32, #tpu.memory_space<vmem>>, vector<1x1x2x128xf32>
      tpu.vector_store %arg5[%c0_47, %c0_48, %c0_49, %c0_50], %67 {strides = array<i32>} : memref<1x1x2x128xf32, #tpu.memory_space<vmem>>, vector<1x1x2x128xf32>,
    } else {
    }
    %c0 = arith.constant 0 : index
    %c0_1 = arith.constant 0 : index
    %c0_2 = arith.constant 0 : index
    %c0_3 = arith.constant 0 : index
    %3 = vector.load %arg3[%c0, %c0_1, %c0_2, %c0_3] : memref<1x4x2x128xf32, #tpu.memory_space<vmem>>, vector<1x1x2x128xf32>
    %4 = vector.shape_cast %3 : vector<1x1x2x128xf32> to vector<2x128xf32>
    %c0_4 = arith.constant 0 : index
    %c1 = arith.constant 1 : index
    %c0_5 = arith.constant 0 : index
    %c0_6 = arith.constant 0 : index
    %5 = vector.load %arg3[%c0_4, %c1, %c0_5, %c0_6] : memref<1x4x2x128xf32, #tpu.memory_space<vmem>>, vector<1x1x2x128xf32>
    %6 = vector.shape_cast %5 : vector<1x1x2x128xf32> to vector<2x128xf32>
    %7 = arith.maximumf %4, %6 : vector<2x128xf32>
    %c0_7 = arith.constant 0 : index
    %c2 = arith.constant 2 : index
    %c0_8 = arith.constant 0 : index
    %c0_9 = arith.constant 0 : index
    %8 = vector.load %arg3[%c0_7, %c2, %c0_8, %c0_9] : memref<1x4x2x128xf32, #tpu.memory_space<vmem>>, vector<1x1x2x128xf32>
    %9 = vector.shape_cast %8 : vector<1x1x2x128xf32> to vector<2x128xf32>
    %10 = arith.maximumf %7, %9 : vector<2x128xf32>
    %c0_10 = arith.constant 0 : index
    %c3 = arith.constant 3 : index
    %c0_11 = arith.constant 0 : index
    %c0_12 = arith.constant 0 : index
    %11 = vector.load %arg3[%c0_10, %c3, %c0_11, %c0_12] : memref<1x4x2x128xf32, #tpu.memory_space<vmem>>, vector<1x1x2x128xf32>
    %12 = vector.shape_cast %11 : vector<1x1x2x128xf32> to vector<2x128xf32>
    %13 = arith.maximumf %10, %12 : vector<2x128xf32>
    %c0_13 = arith.constant 0 : index
    %c0_14 = arith.constant 0 : index
    %c0_15 = arith.constant 0 : index
    %c0_16 = arith.constant 0 : index
    %14 = vector.load %arg4[%c0_13, %c0_14, %c0_15, %c0_16] : memref<1x1x2x128xi32, #tpu.memory_space<vmem>>, vector<1x1x2x128xi32>
    %15 = vector.shape_cast %14 : vector<1x1x2x128xi32> to vector<2x128xi32>
    %cst = arith.constant 0.000000e+00 : f32
    %16 = vector.broadcast %cst : f32 to vector<2x128xf32>
    %cst_17 = arith.constant 0.000000e+00 : f32
    %17 = vector.broadcast %cst_17 : f32 to vector<2x128xf32>
    %c0_18 = arith.constant 0 : index
    %c0_19 = arith.constant 0 : index
    %c0_20 = arith.constant 0 : index
    %c0_21 = arith.constant 0 : index
    %18 = vector.load %arg3[%c0_18, %c0_19, %c0_20, %c0_21] : memref<1x4x2x128xf32, #tpu.memory_space<vmem>>, vector<1x1x2x128xf32>
    %19 = vector.shape_cast %18 : vector<1x1x2x128xf32> to vector<2x128xf32>
    %20 = arith.subf %19, %13 : vector<2x128xf32>
    %21 = math.exp %20 : vector<2x128xf32>
    %22 = arith.addf %16, %21 : vector<2x128xf32>
    %c0_i32_22 = arith.constant 0 : i32
    %23 = vector.broadcast %c0_i32_22 : i32 to vector<2x128xi32>
    %24 = arith.cmpi eq, %15, %23 : vector<2x128xi32>
    %25 = arith.select %24, %19, %17 : vector<2x128xi1>, vector<2x128xf32>
    %c0_23 = arith.constant 0 : index
    %c1_24 = arith.constant 1 : index
    %c0_25 = arith.constant 0 : index
    %c0_26 = arith.constant 0 : index
    %26 = vector.load %arg3[%c0_23, %c1_24, %c0_25, %c0_26] : memref<1x4x2x128xf32, #tpu.memory_space<vmem>>, vector<1x1x2x128xf32>
    %27 = vector.shape_cast %26 : vector<1x1x2x128xf32> to vector<2x128xf32>
    %28 = arith.subf %27, %13 : vector<2x128xf32>
    %29 = math.exp %28 : vector<2x128xf32>
    %30 = arith.addf %22, %29 : vector<2x128xf32>
    %c1_i32 = arith.constant 1 : i32
    %31 = vector.broadcast %c1_i32 : i32 to vector<2x128xi32>
    %32 = arith.cmpi eq, %15, %31 : vector<2x128xi32>
    %33 = arith.select %32, %27, %25 : vector<2x128xi1>, vector<2x128xf32>
    %c0_27 = arith.constant 0 : index
    %c2_28 = arith.constant 2 : index
    %c0_29 = arith.constant 0 : index
    %c0_30 = arith.constant 0 : index
    %34 = vector.load %arg3[%c0_27, %c2_28, %c0_29, %c0_30] : memref<1x4x2x128xf32, #tpu.memory_space<vmem>>, vector<1x1x2x128xf32>
    %35 = vector.shape_cast %34 : vector<1x1x2x128xf32> to vector<2x128xf32>
    %36 = arith.subf %35, %13 : vector<2x128xf32>
    %37 = math.exp %36 : vector<2x128xf32>
    %38 = arith.addf %30, %37 : vector<2x128xf32>
    %c2_i32 = arith.constant 2 : i32
    %39 = vector.broadcast %c2_i32 : i32 to vector<2x128xi32>
    %40 = arith.cmpi eq, %15, %39 : vector<2x128xi32>
    %41 = arith.select %40, %35, %33 : vector<2x128xi1>, vector<2x128xf32>
    %c0_31 = arith.constant 0 : index
    %c3_32 = arith.constant 3 : index
    %c0_33 = arith.constant 0 : index
    %c0_34 = arith.constant 0 : index
    %42 = vector.load %arg3[%c0_31, %c3_32, %c0_33, %c0_34] : memref<1x4x2x128xf32, #tpu.memory_space<vmem>>, vector<1x1x2x128xf32>
    %43 = vector.shape_cast %42 : vector<1x1x2x128xf32> to vector<2x128xf32>
    %44 = arith.subf %43, %13 : vector<2x128xf32>
    %45 = math.exp %44 : vector<2x128xf32>
    %46 = arith.addf %38, %45 : vector<2x128xf32>
    %c3_i32 = arith.constant 3 : i32
    %47 = vector.broadcast %c3_i32 : i32 to vector<2x128xi32>
    %48 = arith.cmpi eq, %15, %47 : vector<2x128xi32>
    %49 = arith.select %48, %43, %41 : vector<2x128xi1>, vector<2x128xf32>
    %50 = math.log %46 : vector<2x128xf32>
    %51 = arith.addf %13, %50 : vector<2x128xf32>
    %52 = arith.subf %51, %49 : vector<2x128xf32>
    %cst_35 = arith.constant 0.000000e+00 : f32
    %53 = vector.broadcast %cst_35 : f32 to vector<2x128xf32>
    %54 = arith.maximumf %52, %53 : vector<2x128xf32>
    %cst_36 = arith.constant 1.000000e+00 : f32
    %55 = vector.broadcast %cst_36 : f32 to vector<2x128xf32>
    %56 = arith.mulf %55, %54 : vector<2x128xf32>
    %c255_i32 = arith.constant 255 : i32
    %57 = vector.broadcast %c255_i32 : i32 to vector<2x128xi32>
    %58 = arith.cmpi ne, %15, %57 : vector<2x128xi32>
    %c0_37 = arith.constant 0 : index
    %c0_38 = arith.constant 0 : index
    %c0_39 = arith.constant 0 : index
    %c0_40 = arith.constant 0 : index
    %59 = vector.load %arg5[%c0_37, %c0_38, %c0_39, %c0_40] : memref<1x1x2x128xf32, #tpu.memory_space<vmem>>, vector<1x1x2x128xf32>
    %60 = vector.shape_cast %59 : vector<1x1x2x128xf32> to vector<2x128xf32>
    %cst_41 = arith.constant 0.000000e+00 : f32
    %61 = vector.broadcast %cst_41 : f32 to vector<2x128xf32>
    %62 = arith.select %58, %56, %61 : vector<2x128xi1>, vector<2x128xf32>
    %63 = arith.addf %60, %62 : vector<2x128xf32>
    %c0_42 = arith.constant 0 : index
    %c0_43 = arith.constant 0 : index
    %c0_44 = arith.constant 0 : index
    %c0_45 = arith.constant 0 : index
    %64 = vector.load %arg5[%c0_42, %c0_43, %c0_44, %c0_45] : memref<1x1x2x128xf32, #tpu.memory_space<vmem>>, vector<1x1x2x128xf32>
    %65 = vector.shape_cast %64 : vector<1x1x2x128xf32> to vector<2x128xf32>
    %66 = vector.shape_cast %63 : vector<2x128xf32> to vector<1x1x2x128xf32>
    tpu.vector_store %arg5[%c0_42, %c0_43, %c0_44, %c0_45], %66 {strides = array<i32>} : memref<1x1x2x128xf32, #tpu.memory_space<vmem>>, vector<1x1x2x128xf32>,
    return
  }
  func.func @transform_0(%arg0: i32, %arg1: i32, %arg2: i32) -> (i32, i32, i32, i32) {
    %c1_i32 = arith.constant 1 : i32
    %0 = arith.muli %arg0, %c1_i32 : i32
    %1 = arith.addi %0, %arg2 : i32
    %c0_i32 = arith.constant 0 : i32
    %2 = arith.minsi %1, %c0_i32 : i32
    %c0_i32_0 = arith.constant 0 : i32
    %c0_i32_1 = arith.constant 0 : i32
    %c0_i32_2 = arith.constant 0 : i32
    return %arg1, %c0_i32_0, %2, %c0_i32_1 : i32, i32, i32, i32
  }
  func.func @transform_1(%arg0: i32, %arg1: i32, %arg2: i32) -> (i32, i32, i32, i32) {
    %c1_i32 = arith.constant 1 : i32
    %0 = arith.muli %arg0, %c1_i32 : i32
    %1 = arith.addi %0, %arg2 : i32
    %c0_i32 = arith.constant 0 : i32
    %2 = arith.minsi %1, %c0_i32 : i32
    %c0_i32_0 = arith.constant 0 : i32
    %c0_i32_1 = arith.constant 0 : i32
    %c0_i32_2 = arith.constant 0 : i32
    return %arg1, %c0_i32_0, %2, %c0_i32_1 : i32, i32, i32, i32
  }
  func.func @transform_2(%arg0: i32, %arg1: i32, %arg2: i32) -> (i32, i32, i32, i32) {
    %c0_i32 = arith.constant 0 : i32
    %c0_i32_0 = arith.constant 0 : i32
    %c0_i32_1 = arith.constant 0 : i32
    return %arg0, %arg1, %c0_i32, %c0_i32_0 : i32, i32, i32, i32
  }
}

</mosaic_0001>

<llo_original>
// kernel: tpu_custom_call.1
$region0: #{tpu_custom_call.1}
  #allocation0 [shape = 'u32[]', space=smem, size = 0x4, offset = 0x4, fixed_abs, tag = 'smem constant byte address 0x4 - core index']
  #allocation1 [shape = 'u32[144,128]{1,0:T(1,128)}', space=vmem, size = 0x12000, scoped, tag = 'internal scratch']
  %s0 = inlined_call_operand.hbm [shape: f32[2,4,2,128], index: 0, kind: input, shape index: {}]
  %s1 = inlined_call_operand.hbm [shape: s32[2,1,2,128], index: 1, kind: input, shape index: {}]
  %s2 = inlined_call_operand.hbm [shape: f32[1,2,2,128], index: 2, kind: output, shape index: {}]
  %s3 = sld [smem:[#allocation0]]
  $region53: #{tpu_custom_call.1} parent=0
    _
  %s5 = ssub.s32 1, %s3
  %s6 = scalar_select 0, %s5, %s3
  $region1: #{tpu_custom_call.1} parent=0
    #allocation2 [shape = 'u8[8192]{0}', space=vmem, size = 0x2000, scoped, tag = 'input window, operand 0']
    #allocation3 [shape = 's32[2]{0}', space=sflag, size = 0x8, scoped, tag = 'scoped memory for tpu_custom_call.1']
    #allocation4 [shape = 's32[2]{0}', space=sflag, size = 0x8, scoped, tag = 'scoped memory for tpu_custom_call.1']
    #allocation5 [shape = 'u8[2048]{0}', space=vmem, size = 0x800, scoped, tag = 'input window, operand 1']
    #allocation6 [shape = 's32[2]{0}', space=sflag, size = 0x8, scoped, tag = 'scoped memory for tpu_custom_call.1']
    #allocation7 [shape = 'u8[2048]{0}', space=vmem, size = 0x800, scoped, tag = 'output window, operand 0']
    %7 = vsyncpa [#allocation3], 0
    %s8 = scalar_lea.sflag [#allocation3], 1
    %9 = vsyncpa %s8, 0
    %10 = vsyncpa [#allocation6], 0
    %s11 = scalar_lea.sflag [#allocation6], 1
    %12 = vsyncpa %s11, 0
    %13 = vsyncpa [#allocation4], 0
    %s14 = scalar_lea.sflag [#allocation4], 1
    %15 = vsyncpa %s14, 0
    loop: start=0, step=1, limit=4
    $region2: #{tpu_custom_call.1} parent=1 // loop_pre_header
      _
    $region3: #{tpu_custom_call.1} parent=1 // loop_header
      %s17 = sphi 0, %s21
      %p18 = scmp.ge.s32.totalorder %s17, 4
      %s24 = sphi 0, %s43
      %s25 = sphi 0, %s39
      %s26 = sphi 0, %s35
      %s27 = sphi 0, %s24
      %s28 = sphi 0, %s25
      %s29 = sphi 0, %s26
      %s30 = sphi 0, %s27
      %s31 = sphi 0, %s28
      %s32 = sphi 0, %s29
      %s54 = sphi 0, %s56
      %s57 = sphi 0, %s54
      %s58 = sphi 0, %s57
      %s74 = sphi 0, %s58
      %s88 = sphi 0, %s90
      %s91 = sphi 0, %s88
      %s92 = sphi 0, %s91
      %s108 = sphi 0, %s92
      %s116 = sphi 0, %s118
      %s119 = sphi 0, %s116
      %s120 = sphi 0, %s119
      %s136 = sphi 0, %s120
    $region4: #{tpu_custom_call.1} parent=1 // loop_header_branch
      %20 = sbr.rel (%p18) target = $region8
    $region5: #{tpu_custom_call.1} parent=1 // loop_body
      %s22 = ssub.s32 %s17, 1
      %s23 = ssub.s32 %s17, 2
      %s33 = sadd.s32 1, %s26
      %p34 = scmp.ge.s32.totalorder %s33, 1
      %s35 = scalar_select %p34, 0, %s33
      %s36 = sadd.s32 1, %s25
      %s37 = scalar_select %p34, %s36, %s25
      %p38 = scmp.ge.s32.totalorder %s37, 2
      %s39 = scalar_select %p38, 0, %s37
      %s40 = sadd.s32 1, %s24
      %s41 = scalar_select %p38, %s40, %s24
      %p42 = scmp.ge.s32.totalorder %s41, 1
      %s43 = scalar_select %p42, 0, %s41
      %s44 = sadd.s32 %s24, %s26
      %p45 = scmp.lt.s32.totalorder %s44, 0
      %s46 = scalar_select %p45, %s44, 0
      %s47 = sadd.s32 %s43, %s35
      %p48 = scmp.lt.s32.totalorder %s47, 0
      %s49 = scalar_select %p48, %s47, 0
      %s50 = ssub.s32 %s25, %s39
      %s51 = ssub.s32 %s46, %s49
      %s52 = sor.u32 %s50, %s51
      %p53 = scmp.eq.s32.totalorder %s52, 0
      %s55 = sadd.s32 %s54, 1
      %s56 = scalar_select %p53, %s54, %s55
      %p59 = pneg %p53
      %p60 = scmp.eq.s32.totalorder %s17, 1
      %p61 = por %p59, %p60
      %p62 = scmp.ne.s32.totalorder %s54, %s57
      %p63 = scmp.eq.s32.totalorder %s17, 0
      %p64 = por %p62, %p63
      %p65 = scmp.ne.s32.totalorder %s54, %s57
      %p66 = scmp.eq.s32.totalorder %s22, 1
      %p67 = por %p65, %p66
      %p68 = scmp.ne.s32.totalorder %s57, %s58
      %p69 = scmp.eq.s32.totalorder %s22, 0
      %p70 = por %p68, %p69
      %p71 = scmp.ne.s32.totalorder %s57, %s58
      %p72 = scmp.eq.s32.totalorder %s23, 1
      %p73 = por %p71, %p72
      %p75 = scmp.ne.s32.totalorder %s58, %s74
      %p76 = scmp.eq.s32.totalorder %s23, 0
      %p77 = por %p75, %p76
      %s78 = sadd.s32 %s24, %s26
      %p79 = scmp.lt.s32.totalorder %s78, 0
      %s80 = scalar_select %p79, %s78, 0
      %s81 = sadd.s32 %s43, %s35
      %p82 = scmp.lt.s32.totalorder %s81, 0
      %s83 = scalar_select %p82, %s81, 0
      %s84 = ssub.s32 %s25, %s39
      %s85 = ssub.s32 %s80, %s83
      %s86 = sor.u32 %s84, %s85
      %p87 = scmp.eq.s32.totalorder %s86, 0
      %s89 = sadd.s32 %s88, 1
      %s90 = scalar_select %p87, %s88, %s89
      %p93 = pneg %p87
      %p94 = scmp.eq.s32.totalorder %s17, 1
      %p95 = por %p93, %p94
      %p96 = scmp.ne.s32.totalorder %s88, %s91
      %p97 = scmp.eq.s32.totalorder %s17, 0
      %p98 = por %p96, %p97
      %p99 = scmp.ne.s32.totalorder %s88, %s91
      %p100 = scmp.eq.s32.totalorder %s22, 1
      %p101 = por %p99, %p100
      %p102 = scmp.ne.s32.totalorder %s91, %s92
      %p103 = scmp.eq.s32.totalorder %s22, 0
      %p104 = por %p102, %p103
      %p105 = scmp.ne.s32.totalorder %s91, %s92
      %p106 = scmp.eq.s32.totalorder %s23, 1
      %p107 = por %p105, %p106
      %p109 = scmp.ne.s32.totalorder %s92, %s108
      %p110 = scmp.eq.s32.totalorder %s23, 0
      %p111 = por %p109, %p110
      %s112 = ssub.s32 %s24, %s43
      %s113 = ssub.s32 %s25, %s39
      %s114 = sor.u32 %s112, %s113
      %p115 = scmp.eq.s32.totalorder %s114, 0
      %s117 = sadd.s32 %s116, 1
      %s118 = scalar_select %p115, %s116, %s117
      %p121 = pneg %p115
      %p122 = scmp.eq.s32.totalorder %s17, 1
      %p123 = por %p121, %p122
      %p124 = scmp.ne.s32.totalorder %s116, %s119
      %p125 = scmp.eq.s32.totalorder %s17, 0
      %p126 = por %p124, %p125
      %p127 = scmp.ne.s32.totalorder %s116, %s119
      %p128 = scmp.eq.s32.totalorder %s22, 1
      %p129 = por %p127, %p128
      %p130 = scmp.ne.s32.totalorder %s119, %s120
      %p131 = scmp.eq.s32.totalorder %s22, 0
      %p132 = por %p130, %p131
      %p133 = scmp.ne.s32.totalorder %s119, %s120
      %p134 = scmp.eq.s32.totalorder %s23, 1
      %p135 = por %p133, %p134
      %p137 = scmp.ne.s32.totalorder %s120, %s136
      %p138 = scmp.eq.s32.totalorder %s23, 0
      %p139 = por %p137, %p138
      %p140 = scmp.le.s32.totalorder 1, %s17
      %p141 = scmp.lt.s32.totalorder %s17, 3
      %p142 = pnand %p140, %p141
      %p143 = pneg %p142
      // Predicated region
      $region9: #{tpu_custom_call.1} parent=5 // pred_check
        _
      $region10: #{tpu_custom_call.1} parent=5 // pred_check_branch
        %145 = sbr.rel (%p142) target = $region12
      $region11: #{tpu_custom_call.1} parent=5 // pred_region
        %s146 = ssub.s32 %s17, 1
      $region12: #{tpu_custom_call.1} parent=5 // pred_fallthru
        _
      %p147 = scmp.lt.s32.totalorder %s17, 2
      // Predicated region
      $region13: #{tpu_custom_call.1} parent=5 // pred_check
        %p148 = pneg %p147
      $region14: #{tpu_custom_call.1} parent=5 // pred_check_branch
        %150 = sbr.rel (%p148) target = $region16
      $region15: #{tpu_custom_call.1} parent=5 // pred_region
        // Predicated region
        $region17: #{tpu_custom_call.1} parent=15 // pred_check
          %p151 = pneg %p64
        $region18: #{tpu_custom_call.1} parent=15 // pred_check_branch
          %153 = sbr.rel (%p151) target = $region20
        $region19: #{tpu_custom_call.1} parent=15 // pred_region
          %s154 = sand.u32 %s54, 1
          %s155 = scalar_lea.sflag [#allocation3], %s154
          %s156 = sand.u32 %s54, 1
          %s157 = smul.addr %s156, 8
          %s158 = scalar_lea.vmem [#allocation2], %s157
          %s159 = sadd.s32 %s24, %s26
          %p160 = scmp.lt.s32.totalorder %s159, 0
          %s161 = scalar_select %p160, %s159, 0
          %s163 = ssub.s32 128, 128
          %164 = vsyncadd %s155, %s163
          %s165 = smul.addr %s25, 4
          %s166 = sadd.s32 %s161, %s165
          %s167 = smul.addr %s166, 32
          %s168 = scalar_lea.hbm %s0, %s167
          %s169 = sshll.u32 %s158, 4
          %s170 = int_to_ptr.vmem [resolvable:$true] %s169
          %175 = dma.hbm_to_vmem [thread:$0]  %s168, 128, %s170, %s155, 32, 32, 2
        $region20: #{tpu_custom_call.1} parent=15 // pred_fallthru
          _
        // Predicated region
        $region21: #{tpu_custom_call.1} parent=15 // pred_check
          %p176 = pneg %p98
        $region22: #{tpu_custom_call.1} parent=15 // pred_check_branch
          %178 = sbr.rel (%p176) target = $region24
        $region23: #{tpu_custom_call.1} parent=15 // pred_region
          %s179 = sand.u32 %s88, 1
          %s180 = scalar_lea.sflag [#allocation6], %s179
          %s181 = sand.u32 %s88, 1
          %s182 = smul.addr %s181, 2
          %s183 = scalar_lea.vmem [#allocation5], %s182
          %s184 = sadd.s32 %s24, %s26
          %p185 = scmp.lt.s32.totalorder %s184, 0
          %s186 = scalar_select %p185, %s184, 0
          %s188 = ssub.s32 32, 32
          %189 = vsyncadd %s180, %s188
          %s190 = sadd.s32 %s186, %s25
          %s191 = smul.addr %s190, 32
          %s192 = scalar_lea.hbm %s1, %s191
          %s194 = sshll.u32 %s183, 4
          %s195 = int_to_ptr.vmem [resolvable:$true] %s194
          %197 = dma.hbm_to_vmem [thread:$0]  %s192, 32, %s195, %s180
        $region24: #{tpu_custom_call.1} parent=15 // pred_fallthru
          _
      $region16: #{tpu_custom_call.1} parent=5 // pred_fallthru
        _
      %p198 = scmp.le.s32.totalorder 1, %s17
      %p199 = scmp.lt.s32.totalorder %s17, 3
      %p200 = pnand %p198, %p199
      %p201 = pneg %p200
      // Predicated region
      $region25: #{tpu_custom_call.1} parent=5 // pred_check
        _
      $region26: #{tpu_custom_call.1} parent=5 // pred_check_branch
        %203 = sbr.rel (%p200) target = $region28
      $region27: #{tpu_custom_call.1} parent=5 // pred_region
        %s204 = ssub.s32 %s17, 1
        %s205 = sand.u32 %s57, 1
        %s206 = scalar_lea.sflag [#allocation3], %s205
        %s207 = sand.u32 %s57, 1
        %s208 = smul.addr %s207, 8
        %s209 = scalar_lea.vmem [#allocation2], %s208
        // Predicated region
        $region29: #{tpu_custom_call.1} parent=27 // pred_check
          %p210 = pneg %p70
        $region30: #{tpu_custom_call.1} parent=27 // pred_check_branch
          %212 = sbr.rel (%p210) target = $region32
        $region31: #{tpu_custom_call.1} parent=27 // pred_region
          %213 = dma.done %s206, 128
        $region32: #{tpu_custom_call.1} parent=27 // pred_fallthru
          _
        %s214 = sand.u32 %s91, 1
        %s215 = scalar_lea.sflag [#allocation6], %s214
        %s216 = sand.u32 %s91, 1
        %s217 = smul.addr %s216, 2
        %s218 = scalar_lea.vmem [#allocation5], %s217
        // Predicated region
        $region33: #{tpu_custom_call.1} parent=27 // pred_check
          %p219 = pneg %p104
        $region34: #{tpu_custom_call.1} parent=27 // pred_check_branch
          %221 = sbr.rel (%p219) target = $region36
        $region35: #{tpu_custom_call.1} parent=27 // pred_region
          %222 = dma.done %s215, 32
        $region36: #{tpu_custom_call.1} parent=27 // pred_fallthru
          _
        %s223 = sand.u32 %s57, 1
        %s224 = scalar_lea.sflag [#allocation3], %s223
        %s225 = sand.u32 %s57, 1
        %s226 = smul.addr %s225, 8
        %s227 = scalar_lea.vmem [#allocation2], %s226
        %p228 = pneg %p70
        %p229 = pneg %p67
        %s230 = sand.u32 %s91, 1
        %s231 = scalar_lea.sflag [#allocation6], %s230
        %s232 = sand.u32 %s91, 1
        %s233 = smul.addr %s232, 2
        %s234 = scalar_lea.vmem [#allocation5], %s233
        %p235 = pneg %p104
        %p236 = pneg %p101
        %p237 = pneg %p132
        %p238 = pneg %p129
        %s239 = sand.u32 %s119, 1
        %s240 = scalar_lea.sflag [#allocation4], %s239
        %s241 = sand.u32 %s119, 1
        %s242 = smul.addr %s241, 2
        %s243 = scalar_lea.vmem [#allocation7], %s242
        %s244 = sadd.s32 %s27, %s29
        %p245 = scmp.lt.s32.totalorder %s244, 0
        %s246 = scalar_select %p245, %s244, 0
        %s247 = sadd.s32 %s27, %s29
        %p248 = scmp.lt.s32.totalorder %s247, 0
        %s249 = scalar_select %p248, %s247, 0
        %p250 = scmp.eq.s32.totalorder %s29, 0
        // Predicated region
        $region37: #{tpu_custom_call.1} parent=27 // pred_check
          %p251 = pneg %p250
        $region38: #{tpu_custom_call.1} parent=27 // pred_check_branch
          %253 = sbr.rel (%p251) target = $region40
        $region39: #{tpu_custom_call.1} parent=27 // pred_region
          %254 = vst [vmem:[%s243] sm:$0x3] 0.0
        $region40: #{tpu_custom_call.1} parent=27 // pred_fallthru
          _
        %v255 = vld [vmem:[%s209] sm:$0x3]
        %s256 = scalar_lea.vmem %s209, 2 [#allocation2]
        %v257 = vld [vmem:[%s256] sm:$0x3]
        %v258 = vmax.f32 %v255, %v257
        %s259 = scalar_lea.vmem %s209, 4 [#allocation2]
        %v260 = vld [vmem:[%s259] sm:$0x3]
        %v261 = vmax.f32 %v258, %v260
        %s262 = scalar_lea.vmem %s209, 6 [#allocation2]
        %v263 = vld [vmem:[%s262] sm:$0x3]
        %v264 = vmax.f32 %v261, %v263
        %v265 = vld [vmem:[%s218] sm:$0x3]
        %v266 = vsub.f32 %v255, %v264
        %v267 = vmul.f32 %v266, 1.442695
        %v268 = vpow.pop %v267
        %v269 = vadd.f32 %v268, 0.0
        %vm270 = vcmp.eq.s32.totalorder %v265, 0
        %v271 = vsel %vm270, %v255, 0.0
        %v272 = vsub.f32 %v257, %v264
        %v273 = vmul.f32 %v272, 1.442695
        %v274 = vpow.pop %v273
        %v275 = vadd.f32 %v269, %v274
        %vm276 = vcmp.eq.s32.totalorder %v265, 1
        %v277 = vsel %vm276, %v257, %v271
        %v278 = vsub.f32 %v260, %v264
        %v279 = vmul.f32 %v278, 1.442695
        %v280 = vpow.pop %v279
        %v281 = vadd.f32 %v275, %v280
        %vm282 = vcmp.eq.s32.totalorder %v265, 2
        %v283 = vsel %vm282, %v260, %v277
        %v284 = vsub.f32 %v263, %v264
        %v285 = vmul.f32 %v284, 1.442695
        %v286 = vpow.pop %v285
        %v287 = vadd.f32 %v281, %v286
        %vm288 = vcmp.eq.s32.totalorder %v265, 3
        %v289 = vsel %vm288, %v263, %v283
        %v290 = vlog2.pop %v287
        %v291 = vmul.f32 %v290, 0.6931472
        %v292 = vadd.f32 %v264, %v291
        %v293 = vsub.f32 %v292, %v289
        %v294 = vmax.f32 %v293, 0.0
        %vm295 = vcmp.ne.s32.totalorder %v265, 255
        %v296 = vld [vmem:[%s243] sm:$0x3]
        %v297 = vsel %vm295, %v294, 0.0
        %v298 = vadd.f32 %v296, %v297
        %299 = vst [vmem:[%s243] sm:$0x3] %v298
        %s300 = sand.u32 %s119, 1
        %s301 = scalar_lea.sflag [#allocation4], %s300
        %s302 = sand.u32 %s119, 1
        %s303 = smul.addr %s302, 2
        %s304 = scalar_lea.vmem [#allocation7], %s303
        // Predicated region
        $region41: #{tpu_custom_call.1} parent=27 // pred_check
          %p305 = pneg %p129
        $region42: #{tpu_custom_call.1} parent=27 // pred_check_branch
          %307 = sbr.rel (%p305) target = $region44
        $region43: #{tpu_custom_call.1} parent=27 // pred_region
          %s309 = ssub.s32 32, 32
          %310 = vsyncadd %s301, %s309
          %s311 = smul.addr %s27, 2
          %s312 = sadd.s32 %s28, %s311
          %s313 = smul.addr %s312, 32
          %s314 = scalar_lea.hbm %s2, %s313
          %s316 = sshll.u32 %s304, 4
          %s317 = int_to_ptr.vmem [resolvable:$true] %s316
          %319 = dma.vmem_to_hbm [thread:$0]  %s317, 32, %s314, %s301
        $region44: #{tpu_custom_call.1} parent=27 // pred_fallthru
          _
      $region28: #{tpu_custom_call.1} parent=5 // pred_fallthru
        _
      %p320 = scmp.le.s32.totalorder 2, %s17
      // Predicated region
      $region45: #{tpu_custom_call.1} parent=5 // pred_check
        %p321 = pneg %p320
      $region46: #{tpu_custom_call.1} parent=5 // pred_check_branch
        %323 = sbr.rel (%p321) target = $region48
      $region47: #{tpu_custom_call.1} parent=5 // pred_region
        %s324 = ssub.s32 %s17, 2
        // Predicated region
        $region49: #{tpu_custom_call.1} parent=47 // pred_check
          %p325 = pneg %p135
        $region50: #{tpu_custom_call.1} parent=47 // pred_check_branch
          %327 = sbr.rel (%p325) target = $region52
        $region51: #{tpu_custom_call.1} parent=47 // pred_region
          %s328 = sand.u32 %s120, 1
          %s329 = scalar_lea.sflag [#allocation4], %s328
          %s330 = sand.u32 %s120, 1
          %s331 = smul.addr %s330, 2
          %s332 = scalar_lea.vmem [#allocation7], %s331
          %333 = dma.done %s329, 32
        $region52: #{tpu_custom_call.1} parent=47 // pred_fallthru
          _
      $region48: #{tpu_custom_call.1} parent=5 // pred_fallthru
        _
    $region6: #{tpu_custom_call.1} parent=1 // loop_footer
      %s21 = sadd.s32 1, %s17
    $region7: #{tpu_custom_call.1} parent=1 // loop_footer_branch
      %16 = sbr.rel target = $region3
    $region8: #{tpu_custom_call.1} parent=1 // loop_exit
      _
    %334 = vsyncpa [#allocation3], 1
    %s335 = scalar_lea.sflag [#allocation3], 1
    %336 = vsyncpa %s335, 1
    %337 = vsyncpa [#allocation6], 1
    %s338 = scalar_lea.sflag [#allocation6], 1
    %339 = vsyncpa %s338, 1
    %340 = vsyncpa [#allocation4], 1
    %s341 = scalar_lea.sflag [#allocation4], 1
    %342 = vsyncpa %s341, 1

</llo_original>
